<compile_context>
chip_gen: v6e
topology: v6e:2x2x1
jax: 0.10.0
libtpu: 0.0.40
codegen_flags: <defaults>
</compile_context>

<pallas_src>
import functools

import jax
import jax.numpy as jnp
from jax.experimental import pallas as pl
from jax.experimental.pallas import tpu as pltpu


_CHART_PARAMS = {
    "SIC": (11, 12),   # (replace_value, num_classes)
    "SOD": (6, 7),
    "FLOE": (7, 8),
}


def _mse_from_logits_kernel(x_ref, t_ref, out_ref, acc_ref, *,
                            num_classes, ignore_index, replace_value,
                            spatial, tile_s, num_s_per_split, ragged):
    s_idx = pl.program_id(2)

    # Zero the per-core accumulator at the start of each (batch, split) loop.
    @pl.when(s_idx == 0)
    def _():
        acc_ref[...] = jnp.zeros_like(acc_ref)

    x = x_ref[0].astype(jnp.float32)            # (C, TILE_S) logits
    t = t_ref[0]                                # (1, TILE_S) int32 targets
    t = jnp.where(t == ignore_index, replace_value, t)

    if ragged:
        # Column validity for partial / phantom spatial tiles.  Mask logits
        # *before* the softmax so padded-read garbage cannot produce inf/NaN,
        # and mask the accumulated row so invalid columns contribute zero.
        p_idx = pl.program_id(1)
        global_tile = p_idx * num_s_per_split + s_idx
        col = global_tile * tile_s + jax.lax.broadcasted_iota(
            jnp.int32, (1, tile_s), 1)
        col_valid = col < spatial               # (1, TILE_S)
        x = jnp.where(col_valid, x, 0.0)

    # Numerically-stable softmax over the class (sublane) axis.
    m = jnp.max(x, axis=0, keepdims=True)       # (1, TILE_S)
    e = jnp.exp(x - m)
    s = jnp.sum(e, axis=0, keepdims=True)       # (1, TILE_S)
    p = e * pl.reciprocal(s, approx=False)      # (C, TILE_S) softmax probs

    # One-hot target via a sublane class iota vs the lane-dense target row.
    cls = jax.lax.broadcasted_iota(jnp.int32, (num_classes, tile_s), 0)
    one_hot = (cls == t).astype(jnp.float32)

    diff = p - one_hot
    sq = diff * diff

    # Drop the last class with a static sublane slice (loss[:, :-1, :, :]),
    # reduce over classes to one lane-dense row, then accumulate.
    row = jnp.sum(sq[:num_classes - 1, :], axis=0, keepdims=True)   # (1, TILE_S)
    if ragged:
        row = jnp.where(col_valid, row, 0.0)
    acc_ref[...] += row

    # Single full reduction + store once per (batch, split).
    @pl.when(s_idx == pl.num_programs(2) - 1)
    def _():
        total = jnp.sum(acc_ref[...])
        out_ref[...] = jnp.full((1, 1, 8, 128), total, dtype=jnp.float32)


def mse_loss_from_logits(output, target, *, chart="SIC", ignore_index=-100,
                         max_tile_s=65536, spatial_splits=None):
    """Pallas equivalent of MSELossFromLogits.forward.

    output: (N, C, H, W) float logits (NCHW, native dtype)
    target: (N, H, W)    int class indices (may contain ignore_index)
    returns scalar float32 loss.
    """
    if chart not in _CHART_PARAMS:
        raise NameError(f"The chart '{chart}' is not recognized")
    replace_value, num_classes = _CHART_PARAMS[chart]

    N, C, H, W = output.shape
    assert C == num_classes, (C, num_classes)
    S = H * W

    # Free, contiguous reshapes — no transpose, no pad, no wrapper dtype cast.
    x = output.reshape(N, C, S)
    t = target.reshape(N, 1, S).astype(jnp.int32)

    # ---- lane-dim tile selection -------------------------------------------
    max_tile_s = max(128, (max_tile_s // 128) * 128)
    padded_s = pl.cdiv(S, 128) * 128
    if padded_s <= max_tile_s:
        tile_s = padded_s                        # one tile covers the spatial dim
    else:
        tile_s = max_tile_s
        if S % 128 == 0:
            # Prefer a tile that evenly divides S (no ragged last tile), as long
            # as it stays large enough to amortize per-step pipeline overhead.
            for cand in range(max_tile_s, max(128, max_tile_s // 2) - 1, -128):
                if S % cand == 0:
                    tile_s = cand
                    break

    num_s_total = pl.cdiv(S, tile_s)

    # ---- optional spatial split (keeps both v7x TensorCores busy for N==1) --
    if spatial_splits is None:
        spatial_splits = 2 if (N == 1 and num_s_total >= 2) else 1
    spatial_splits = max(1, min(int(spatial_splits), num_s_total))
    num_s_per_split = pl.cdiv(num_s_total, spatial_splits)
    phantom = spatial_splits * num_s_per_split > num_s_total
    ragged = spatial_splits * num_s_per_split * tile_s != S

    if phantom:
        # Clamp phantom tiles onto the last real tile; their contribution is
        # zeroed in-kernel by the column mask.
        def s_block(p, s):
            return jnp.minimum(p * num_s_per_split + s, num_s_total - 1)
    else:
        def s_block(p, s):
            return p * num_s_per_split + s

    kernel = functools.partial(
        _mse_from_logits_kernel,
        num_classes=num_classes,
        ignore_index=ignore_index,
        replace_value=replace_value,
        spatial=S,
        tile_s=tile_s,
        num_s_per_split=num_s_per_split,
        ragged=ragged,
    )

    # VMEM budget: double-buffered logits + targets, (1, tile_s) accumulator.
    # Raise the scoped limit (v5e default is 16 MiB) with generous headroom,
    # but stay well under v7x's 64 MiB physical VMEM.
    itemsize = jnp.dtype(output.dtype).itemsize
    est = (2 * C * tile_s * itemsize + 2 * tile_s * 4 + tile_s * 4
           + 2 * 8 * 128 * 4)
    vmem_limit = int(min(max(4 * est, 32 << 20), 60 << 20))

    partials = pl.pallas_call(
        kernel,
        out_shape=jax.ShapeDtypeStruct((N, spatial_splits, 8, 128), jnp.float32),
        grid_spec=pltpu.PrefetchScalarGridSpec(
            num_scalar_prefetch=0,
            grid=(N, spatial_splits, num_s_per_split),
            in_specs=[
                pl.BlockSpec((1, C, tile_s),
                             lambda n, p, s: (n, 0, s_block(p, s))),
                pl.BlockSpec((1, 1, tile_s),
                             lambda n, p, s: (n, 0, s_block(p, s))),
            ],
            out_specs=pl.BlockSpec((1, 1, 8, 128), lambda n, p, s: (n, p, 0, 0)),
            scratch_shapes=[pltpu.VMEM((1, tile_s), jnp.float32)],
        ),
        compiler_params=pltpu.CompilerParams(
            dimension_semantics=("parallel", "parallel", "arbitrary"),
            vmem_limit_bytes=vmem_limit),
    )(x, t)

    total = jnp.sum(partials[:, :, 0, 0])
    denom = jnp.float32(N * (num_classes - 1) * H * W)
    return total / denom


def _reference(output, target, *, chart="SIC", ignore_index=-100):
    """Pure-JAX reference mirroring the PyTorch forward exactly."""
    replace_value, num_classes = _CHART_PARAMS[chart]
    tgt = jnp.where(target == ignore_index, replace_value, target)
    one_hot = jax.nn.one_hot(tgt, num_classes, dtype=output.dtype)   # (N,H,W,C)
    one_hot = jnp.transpose(one_hot, (0, 3, 1, 2))                   # (N,C,H,W)
    soft = jax.nn.softmax(output, axis=1)
    loss = (soft - one_hot) ** 2
    loss = loss[:, :-1, :, :]
    return jnp.mean(loss)


if __name__ == "__main__":
    key = jax.random.PRNGKey(0)
    k1, k2, k3, k4, k5, k6 = jax.random.split(key, 6)

    # --- Case 1: SIC chart, N=2, f32 logits, exact (non-ragged) tiling.
    N, C, H, W = 2, 12, 16, 16
    logits = jax.random.normal(k1, (N, C, H, W), dtype=jnp.float32)
    target = jax.random.randint(k2, (N, H, W), 0, C, dtype=jnp.int32)
    ignore = jax.random.bernoulli(k3, p=0.1, shape=(N, H, W))
    target = jnp.where(ignore, jnp.int32(-100), target)

    loss = jax.block_until_ready(
        mse_loss_from_logits(logits, target, chart="SIC"))
    ref = _reference(logits, target, chart="SIC")
    assert jnp.allclose(loss, ref, rtol=1e-5, atol=1e-6), (loss, ref)

    # --- Case 2: FLOE chart, N=1 (exercises the spatial-split parallel axis)
    #     with a ragged last spatial tile (S=400, tile_s=256).
    N, C, H, W = 1, 8, 20, 20
    logits = jax.random.normal(k4, (N, C, H, W), dtype=jnp.float32)
    target = jax.random.randint(k5, (N, H, W), 0, C, dtype=jnp.int32)
    ignore = jax.random.bernoulli(k6, p=0.1, shape=(N, H, W))
    target = jnp.where(ignore, jnp.int32(-100), target)

    loss = jax.block_until_ready(
        mse_loss_from_logits(logits, target, chart="FLOE", max_tile_s=256))
    ref = _reference(logits, target, chart="FLOE")
    assert jnp.allclose(loss, ref, rtol=1e-5, atol=1e-6), (loss, ref)

    # --- Case 3: SOD chart, bf16 logits kept in native dtype end-to-end
    #     (halves HBM traffic on v5e/v6e); in-kernel f32 softmax.
    k7, k8, k9 = jax.random.split(jax.random.PRNGKey(1), 3)
    N, C, H, W = 2, 7, 16, 16
    logits = jax.random.normal(k7, (N, C, H, W),
                               dtype=jnp.float32).astype(jnp.bfloat16)
    target = jax.random.randint(k8, (N, H, W), 0, C, dtype=jnp.int32)
    ignore = jax.random.bernoulli(k9, p=0.1, shape=(N, H, W))
    target = jnp.where(ignore, jnp.int32(-100), target)

    loss = jax.block_until_ready(
        mse_loss_from_logits(logits, target, chart="SOD"))
    ref = _reference(logits.astype(jnp.float32), target, chart="SOD")
    assert jnp.allclose(loss, ref, rtol=1e-4, atol=1e-5), (loss, ref)

    print("KERNEL_OK")
</pallas_src>

<mosaic_0001>
module attributes {stable_mosaic.version = 11 : i64} {
  func.func @_mse_from_logits_kernel(%arg0: i32, %arg1: i32, %arg2: i32, %arg3: memref<1x12x256xf32, #tpu.memory_space<vmem>>, %arg4: memref<1x1x256xi32, #tpu.memory_space<vmem>>, %arg5: memref<1x1x8x128xf32, #tpu.memory_space<vmem>>, %arg6: memref<1x256xf32, #tpu.memory_space<vmem>>) attributes {dimension_semantics = [#tpu.dimension_semantics<parallel>, #tpu.dimension_semantics<parallel>, #tpu.dimension_semantics<arbitrary>], iteration_bounds = array<i64: 2, 1, 1>, scalar_prefetch = 0 : i64, scratch_operands = 1 : i64, tpu.core_type = #tpu.core_type<tc>, window_params = [{transform_indices = @transform_0, window_bounds = array<i64: 1, 12, 256>}, {transform_indices = @transform_1, window_bounds = array<i64: 1, 1, 256>}, {transform_indices = @transform_2, window_bounds = array<i64: 1, 1, 8, 128>}]} {
    %c0_i32 = arith.constant 0 : i32
    %0 = arith.cmpi eq, %arg2, %c0_i32 : i32
    %1 = arith.extui %0 : i1 to i32
    %c0_i32_0 = arith.constant 0 : i32
    %2 = arith.cmpi ne, %1, %c0_i32_0 : i32
    scf.if %2 {
      %cst_14 = arith.constant 0.000000e+00 : f32
      %37 = vector.broadcast %cst_14 : f32 to vector<1x256xf32>
      %c0_15 = arith.constant 0 : index
      %c0_16 = arith.constant 0 : index
      %38 = vector.load %arg6[%c0_15, %c0_16] : memref<1x256xf32, #tpu.memory_space<vmem>>, vector<1x256xf32>
      tpu.vector_store %arg6[%c0_15, %c0_16], %37 {strides = array<i32>} : memref<1x256xf32, #tpu.memory_space<vmem>>, vector<1x256xf32>,
    } else {
    }
    %c0 = arith.constant 0 : index
    %c0_1 = arith.constant 0 : index
    %c0_2 = arith.constant 0 : index
    %3 = vector.load %arg3[%c0, %c0_1, %c0_2] : memref<1x12x256xf32, #tpu.memory_space<vmem>>, vector<1x12x256xf32>
    %4 = vector.shape_cast %3 : vector<1x12x256xf32> to vector<12x256xf32>
    %c0_3 = arith.constant 0 : index
    %c0_4 = arith.constant 0 : index
    %c0_5 = arith.constant 0 : index
    %5 = vector.load %arg4[%c0_3, %c0_4, %c0_5] : memref<1x1x256xi32, #tpu.memory_space<vmem>>, vector<1x1x256xi32>
    %6 = vector.shape_cast %5 : vector<1x1x256xi32> to vector<1x256xi32>
    %c-100_i32 = arith.constant -100 : i32
    %7 = vector.broadcast %c-100_i32 : i32 to vector<1x256xi32>
    %8 = arith.cmpi eq, %6, %7 : vector<1x256xi32>
    %c11_i32 = arith.constant 11 : i32
    %9 = vector.broadcast %c11_i32 : i32 to vector<1x256xi32>
    %10 = arith.select %8, %9, %6 : vector<1x256xi1>, vector<1x256xi32>
    %cst = arith.constant dense<0xFF800000> : vector<256xf32>
    %11 = vector.multi_reduction <maximumf>, %4, %cst [0] : vector<12x256xf32> to vector<256xf32>
    %12 = vector.shape_cast %11 : vector<256xf32> to vector<1x256xf32>
    %13 = vector.broadcast %12 : vector<1x256xf32> to vector<12x256xf32>
    %14 = arith.subf %4, %13 : vector<12x256xf32>
    %15 = math.exp %14 : vector<12x256xf32>
    %cst_6 = arith.constant dense<0.000000e+00> : vector<256xf32>
    %16 = vector.multi_reduction <add>, %15, %cst_6 [0] : vector<12x256xf32> to vector<256xf32>
    %17 = vector.shape_cast %16 : vector<256xf32> to vector<1x256xf32>
    %18 = tpu.reciprocal %17 : vector<1x256xf32> -> vector<1x256xf32>
    %19 = vector.broadcast %18 : vector<1x256xf32> to vector<12x256xf32>
    %20 = arith.mulf %15, %19 : vector<12x256xf32>
    %21 = tpu.iota {dimensions = array<i32: 0>} : vector<12x256xi32>
    %22 = vector.broadcast %10 : vector<1x256xi32> to vector<12x256xi32>
    %23 = arith.cmpi eq, %21, %22 : vector<12x256xi32>
    %24 = arith.extui %23 : vector<12x256xi1> to vector<12x256xi32>
    %25 = arith.sitofp %24 : vector<12x256xi32> to vector<12x256xf32>
    %26 = arith.subf %20, %25 : vector<12x256xf32>
    %27 = arith.mulf %26, %26 : vector<12x256xf32>
    %28 = vector.extract_strided_slice %27 {offsets = [0, 0], sizes = [11, 256], strides = [1, 1]} : vector<12x256xf32> to vector<11x256xf32>
    %cst_7 = arith.constant dense<0.000000e+00> : vector<256xf32>
    %29 = vector.multi_reduction <add>, %28, %cst_7 [0] : vector<11x256xf32> to vector<256xf32>
    %30 = vector.shape_cast %29 : vector<256xf32> to vector<1x256xf32>
    %c0_8 = arith.constant 0 : index
    %c0_9 = arith.constant 0 : index
    %31 = vector.load %arg6[%c0_8, %c0_9] : memref<1x256xf32, #tpu.memory_space<vmem>>, vector<1x256xf32>
    %32 = arith.addf %31, %30 : vector<1x256xf32>
    %c0_10 = arith.constant 0 : index
    %c0_11 = arith.constant 0 : index
    %33 = vector.load %arg6[%c0_10, %c0_11] : memref<1x256xf32, #tpu.memory_space<vmem>>, vector<1x256xf32>
    tpu.vector_store %arg6[%c0_10, %c0_11], %32 {strides = array<i32>} : memref<1x256xf32, #tpu.memory_space<vmem>>, vector<1x256xf32>,
    %c0_i32_12 = arith.constant 0 : i32
    %34 = arith.cmpi eq, %arg2, %c0_i32_12 : i32
    %35 = arith.extui %34 : i1 to i32
    %c0_i32_13 = arith.constant 0 : i32
    %36 = arith.cmpi ne, %35, %c0_i32_13 : i32
    scf.if %36 {
      %c0_14 = arith.constant 0 : index
      %c0_15 = arith.constant 0 : index
      %37 = vector.load %arg6[%c0_14, %c0_15] : memref<1x256xf32, #tpu.memory_space<vmem>>, vector<1x256xf32>
      %38 = vector.shape_cast %37 : vector<1x256xf32> to vector<1x1x256xf32>
      %cst_16 = arith.constant dense<0.000000e+00> : vector<1xf32>
      %39 = vector.multi_reduction <add>, %38, %cst_16 [1, 2] : vector<1x1x256xf32> to vector<1xf32>
      %40 = vector.shape_cast %39 : vector<1xf32> to vector<1x1x1xf32>
      %41 = vector.extract %40[0, 0, 0] : f32 from vector<1x1x1xf32>
      %42 = vector.broadcast %41 : f32 to vector<1x1x8x128xf32>
      %c0_17 = arith.constant 0 : index
      %c0_18 = arith.constant 0 : index
      %c0_19 = arith.constant 0 : index
      %c0_20 = arith.constant 0 : index
      %43 = vector.load %arg5[%c0_17, %c0_18, %c0_19, %c0_20] : memref<1x1x8x128xf32, #tpu.memory_space<vmem>>, vector<1x1x8x128xf32>
      tpu.vector_store %arg5[%c0_17, %c0_18, %c0_19, %c0_20], %42 {strides = array<i32>} : memref<1x1x8x128xf32, #tpu.memory_space<vmem>>, vector<1x1x8x128xf32>,
    } else {
    }
    return
  }
  func.func @transform_0(%arg0: i32, %arg1: i32, %arg2: i32) -> (i32, i32, i32) {
    %c1_i32 = arith.constant 1 : i32
    %0 = arith.muli %arg1, %c1_i32 : i32
    %1 = arith.addi %0, %arg2 : i32
    %c0_i32 = arith.constant 0 : i32
    %c0_i32_0 = arith.constant 0 : i32
    return %arg0, %c0_i32, %1 : i32, i32, i32
  }
  func.func @transform_1(%arg0: i32, %arg1: i32, %arg2: i32) -> (i32, i32, i32) {
    %c1_i32 = arith.constant 1 : i32
    %0 = arith.muli %arg1, %c1_i32 : i32
    %1 = arith.addi %0, %arg2 : i32
    %c0_i32 = arith.constant 0 : i32
    %c0_i32_0 = arith.constant 0 : i32
    return %arg0, %c0_i32, %1 : i32, i32, i32
  }
  func.func @transform_2(%arg0: i32, %arg1: i32, %arg2: i32) -> (i32, i32, i32, i32) {
    %c0_i32 = arith.constant 0 : i32
    %c0_i32_0 = arith.constant 0 : i32
    %c0_i32_1 = arith.constant 0 : i32
    return %arg0, %arg1, %c0_i32, %c0_i32_0 : i32, i32, i32, i32
  }
}

</mosaic_0001>

<llo_original>
// kernel: tpu_custom_call.1
$region0: #{tpu_custom_call.1}
  #allocation0 [shape = 'u32[]', space=smem, size = 0x4, offset = 0x4, fixed_abs, tag = 'smem constant byte address 0x4 - core index']
  #allocation1 [shape = 'u32[144,128]{1,0:T(1,128)}', space=vmem, size = 0x12000, scoped, tag = 'internal scratch']
  #allocation2 [shape = 'f32[1,256]{1,0:T(1,128)}', space=vmem, size = 0x400, scoped, tag = 'scratch operand']
  %s0 = inlined_call_operand.vmem [shape: f32[2,12,256], index: 0, kind: input, shape index: {}]
  %s1 = inlined_call_operand.vmem [shape: s32[2,1,256], index: 1, kind: input, shape index: {}]
  %s2 = inlined_call_operand.hbm [shape: f32[2,1,8,128], index: 2, kind: output, shape index: {}]
  %s3 = sld [smem:[#allocation0]]
  $region49: #{tpu_custom_call.1} parent=0
    _
  %s5 = ssub.s32 1, %s3
  %s6 = scalar_select 0, %s5, %s3
  $region1: #{tpu_custom_call.1} parent=0
    #allocation3 [shape = 'u8[8192]{0}', space=vmem, size = 0x2000, scoped, tag = 'output window, operand 0']
    #allocation4 [shape = 's32[2]{0}', space=sflag, size = 0x8, scoped, tag = 'scoped memory for tpu_custom_call.1']
    %7 = vsyncpa [#allocation4], 0
    %s8 = scalar_lea.sflag [#allocation4], 1
    %9 = vsyncpa %s8, 0
    loop: start=0, step=1, limit=4
    $region2: #{tpu_custom_call.1} parent=1 // loop_pre_header
      _
    $region3: #{tpu_custom_call.1} parent=1 // loop_header
      %s11 = sphi 0, %s15
      %p12 = scmp.ge.s32.totalorder %s11, 4
      %s18 = sphi 0, %s37
      %s19 = sphi 0, %s33
      %s20 = sphi 0, %s29
      %s21 = sphi 0, %s18
      %s22 = sphi 0, %s19
      %s23 = sphi 0, %s20
      %s24 = sphi 0, %s21
      %s25 = sphi 0, %s22
      %s26 = sphi 0, %s23
      %s44 = sphi 0, %s46
      %s47 = sphi 0, %s44
      %s48 = sphi 0, %s47
      %s64 = sphi 0, %s48
      %s74 = sphi 0, %s76
      %s77 = sphi 0, %s74
      %s78 = sphi 0, %s77
      %s94 = sphi 0, %s78
      %s102 = sphi 0, %s104
      %s105 = sphi 0, %s102
      %s106 = sphi 0, %s105
      %s122 = sphi 0, %s106
    $region4: #{tpu_custom_call.1} parent=1 // loop_header_branch
      %14 = sbr.rel (%p12) target = $region8
    $region5: #{tpu_custom_call.1} parent=1 // loop_body
      %s16 = ssub.s32 %s11, 1
      %s17 = ssub.s32 %s11, 2
      %s27 = sadd.s32 1, %s20
      %p28 = scmp.ge.s32.totalorder %s27, 1
      %s29 = scalar_select %p28, 0, %s27
      %s30 = sadd.s32 1, %s19
      %s31 = scalar_select %p28, %s30, %s19
      %p32 = scmp.ge.s32.totalorder %s31, 1
      %s33 = scalar_select %p32, 0, %s31
      %s34 = sadd.s32 1, %s18
      %s35 = scalar_select %p32, %s34, %s18
      %p36 = scmp.ge.s32.totalorder %s35, 2
      %s37 = scalar_select %p36, 0, %s35
      %s38 = sadd.s32 %s19, %s20
      %s39 = sadd.s32 %s33, %s29
      %s40 = ssub.s32 %s18, %s37
      %s41 = ssub.s32 %s38, %s39
      %s42 = sor.u32 %s40, %s41
      %p43 = scmp.eq.s32.totalorder %s42, 0
      %s45 = sadd.s32 %s44, 1
      %s46 = scalar_select %p43, %s44, %s45
      %p49 = pneg %p43
      %p50 = scmp.eq.s32.totalorder %s11, 1
      %p51 = por %p49, %p50
      %p52 = scmp.ne.s32.totalorder %s44, %s47
      %p53 = scmp.eq.s32.totalorder %s11, 0
      %p54 = por %p52, %p53
      %p55 = scmp.ne.s32.totalorder %s44, %s47
      %p56 = scmp.eq.s32.totalorder %s16, 1
      %p57 = por %p55, %p56
      %p58 = scmp.ne.s32.totalorder %s47, %s48
      %p59 = scmp.eq.s32.totalorder %s16, 0
      %p60 = por %p58, %p59
      %p61 = scmp.ne.s32.totalorder %s47, %s48
      %p62 = scmp.eq.s32.totalorder %s17, 1
      %p63 = por %p61, %p62
      %p65 = scmp.ne.s32.totalorder %s48, %s64
      %p66 = scmp.eq.s32.totalorder %s17, 0
      %p67 = por %p65, %p66
      %s68 = sadd.s32 %s19, %s20
      %s69 = sadd.s32 %s33, %s29
      %s70 = ssub.s32 %s18, %s37
      %s71 = ssub.s32 %s68, %s69
      %s72 = sor.u32 %s70, %s71
      %p73 = scmp.eq.s32.totalorder %s72, 0
      %s75 = sadd.s32 %s74, 1
      %s76 = scalar_select %p73, %s74, %s75
      %p79 = pneg %p73
      %p80 = scmp.eq.s32.totalorder %s11, 1
      %p81 = por %p79, %p80
      %p82 = scmp.ne.s32.totalorder %s74, %s77
      %p83 = scmp.eq.s32.totalorder %s11, 0
      %p84 = por %p82, %p83
      %p85 = scmp.ne.s32.totalorder %s74, %s77
      %p86 = scmp.eq.s32.totalorder %s16, 1
      %p87 = por %p85, %p86
      %p88 = scmp.ne.s32.totalorder %s77, %s78
      %p89 = scmp.eq.s32.totalorder %s16, 0
      %p90 = por %p88, %p89
      %p91 = scmp.ne.s32.totalorder %s77, %s78
      %p92 = scmp.eq.s32.totalorder %s17, 1
      %p93 = por %p91, %p92
      %p95 = scmp.ne.s32.totalorder %s78, %s94
      %p96 = scmp.eq.s32.totalorder %s17, 0
      %p97 = por %p95, %p96
      %s98 = ssub.s32 %s18, %s37
      %s99 = ssub.s32 %s19, %s33
      %s100 = sor.u32 %s98, %s99
      %p101 = scmp.eq.s32.totalorder %s100, 0
      %s103 = sadd.s32 %s102, 1
      %s104 = scalar_select %p101, %s102, %s103
      %p107 = pneg %p101
      %p108 = scmp.eq.s32.totalorder %s11, 1
      %p109 = por %p107, %p108
      %p110 = scmp.ne.s32.totalorder %s102, %s105
      %p111 = scmp.eq.s32.totalorder %s11, 0
      %p112 = por %p110, %p111
      %p113 = scmp.ne.s32.totalorder %s102, %s105
      %p114 = scmp.eq.s32.totalorder %s16, 1
      %p115 = por %p113, %p114
      %p116 = scmp.ne.s32.totalorder %s105, %s106
      %p117 = scmp.eq.s32.totalorder %s16, 0
      %p118 = por %p116, %p117
      %p119 = scmp.ne.s32.totalorder %s105, %s106
      %p120 = scmp.eq.s32.totalorder %s17, 1
      %p121 = por %p119, %p120
      %p123 = scmp.ne.s32.totalorder %s106, %s122
      %p124 = scmp.eq.s32.totalorder %s17, 0
      %p125 = por %p123, %p124
      %p126 = scmp.le.s32.totalorder 1, %s11
      %p127 = scmp.lt.s32.totalorder %s11, 3
      %p128 = pnand %p126, %p127
      %p129 = pneg %p128
      // Predicated region
      $region9: #{tpu_custom_call.1} parent=5 // pred_check
        _
      $region10: #{tpu_custom_call.1} parent=5 // pred_check_branch
        %131 = sbr.rel (%p128) target = $region12
      $region11: #{tpu_custom_call.1} parent=5 // pred_region
        %s132 = ssub.s32 %s11, 1
      $region12: #{tpu_custom_call.1} parent=5 // pred_fallthru
        _
      %p133 = scmp.lt.s32.totalorder %s11, 2
      // Predicated region
      $region13: #{tpu_custom_call.1} parent=5 // pred_check
        %p134 = pneg %p133
      $region14: #{tpu_custom_call.1} parent=5 // pred_check_branch
        %136 = sbr.rel (%p134) target = $region16
      $region15: #{tpu_custom_call.1} parent=5 // pred_region
        // Predicated region
        $region17: #{tpu_custom_call.1} parent=15 // pred_check
          %p137 = pneg %p54
        $region18: #{tpu_custom_call.1} parent=15 // pred_check_branch
          %139 = sbr.rel (%p137) target = $region20
        $region19: #{tpu_custom_call.1} parent=15 // pred_region
          %s140 = sadd.s32 %s19, %s20
          %s141 = smul.u32 2, %s140
          %p142 = scmp.lt.s32.totalorder %s18, 1
          %s143 = scalar_select %p142, %s18, 1
          %p144 = scmp.lt.s32.totalorder %s141, 1
          %s145 = scalar_select %p144, %s141, 1
          %s146 = smul.addr %s143, 4
          %s147 = sadd.s32 %s145, %s146
          %s148 = smul.addr %s147, 8
          %s149 = scalar_lea.vmem %s0, %s148
          %s150 = sadd.s32 %s19, %s20
          %s151 = smul.u32 2, %s150
        $region20: #{tpu_custom_call.1} parent=15 // pred_fallthru
          _
        // Predicated region
        $region21: #{tpu_custom_call.1} parent=15 // pred_check
          %p152 = pneg %p84
        $region22: #{tpu_custom_call.1} parent=15 // pred_check_branch
          %154 = sbr.rel (%p152) target = $region24
        $region23: #{tpu_custom_call.1} parent=15 // pred_region
          %s155 = sadd.s32 %s19, %s20
          %s156 = smul.u32 2, %s155
          %p157 = scmp.lt.s32.totalorder %s18, 1
          %s158 = scalar_select %p157, %s18, 1
          %p159 = scmp.lt.s32.totalorder %s156, 1
          %s160 = scalar_select %p159, %s156, 1
          %s161 = smul.addr %s158, 2
          %s162 = sadd.s32 %s160, %s161
          %s163 = scalar_lea.vmem %s1, %s162
          %s164 = sadd.s32 %s19, %s20
          %s165 = smul.u32 2, %s164
        $region24: #{tpu_custom_call.1} parent=15 // pred_fallthru
          _
      $region16: #{tpu_custom_call.1} parent=5 // pred_fallthru
        _
      %p166 = scmp.le.s32.totalorder 1, %s11
      %p167 = scmp.lt.s32.totalorder %s11, 3
      %p168 = pnand %p166, %p167
      %p169 = pneg %p168
      // Predicated region
      $region25: #{tpu_custom_call.1} parent=5 // pred_check
        _
      $region26: #{tpu_custom_call.1} parent=5 // pred_check_branch
        %171 = sbr.rel (%p168) target = $region28
      $region27: #{tpu_custom_call.1} parent=5 // pred_region
        %s172 = ssub.s32 %s11, 1
        %s173 = sadd.s32 %s22, %s23
        %s174 = smul.u32 2, %s173
        %p175 = scmp.lt.s32.totalorder %s21, 1
        %s176 = scalar_select %p175, %s21, 1
        %p177 = scmp.lt.s32.totalorder %s174, 1
        %s178 = scalar_select %p177, %s174, 1
        %s179 = smul.addr %s176, 4
        %s180 = sadd.s32 %s178, %s179
        %s181 = smul.addr %s180, 8
        %s182 = scalar_lea.vmem %s0, %s181
        %p183 = pneg %p60
        %p184 = pneg %p57
        %s185 = sadd.s32 %s22, %s23
        %s186 = smul.u32 2, %s185
        %p187 = scmp.lt.s32.totalorder %s21, 1
        %s188 = scalar_select %p187, %s21, 1
        %p189 = scmp.lt.s32.totalorder %s186, 1
        %s190 = scalar_select %p189, %s186, 1
        %s191 = smul.addr %s188, 2
        %s192 = sadd.s32 %s190, %s191
        %s193 = scalar_lea.vmem %s1, %s192
        %p194 = pneg %p90
        %p195 = pneg %p87
        %p196 = pneg %p118
        %p197 = pneg %p115
        %s198 = sand.u32 %s105, 1
        %s199 = scalar_lea.sflag [#allocation4], %s198
        %s200 = sand.u32 %s105, 1
        %s201 = smul.addr %s200, 8
        %s202 = scalar_lea.vmem [#allocation3], %s201
        %s203 = sadd.s32 %s22, %s23
        %s204 = smul.u32 2, %s203
        %p205 = scmp.lt.s32.totalorder %s21, 1
        %s206 = scalar_select %p205, %s21, 1
        %p207 = scmp.lt.s32.totalorder %s204, 1
        %s208 = scalar_select %p207, %s204, 1
        %s209 = smul.addr %s206, 4
        %s210 = sadd.s32 %s208, %s209
        %s211 = smul.addr %s210, 8
        %s212 = scalar_lea.vmem %s0, %s211
        %s213 = sadd.s32 %s22, %s23
        %s214 = smul.u32 2, %s213
        %s215 = sadd.s32 %s22, %s23
        %s216 = smul.u32 2, %s215
        %p217 = scmp.lt.s32.totalorder %s21, 1
        %s218 = scalar_select %p217, %s21, 1
        %p219 = scmp.lt.s32.totalorder %s216, 1
        %s220 = scalar_select %p219, %s216, 1
        %s221 = smul.addr %s218, 2
        %s222 = sadd.s32 %s220, %s221
        %s223 = scalar_lea.vmem %s1, %s222
        %s224 = sadd.s32 %s22, %s23
        %s225 = smul.u32 2, %s224
        %p226 = scmp.eq.s32.totalorder %s23, 0
        // Predicated region
        $region29: #{tpu_custom_call.1} parent=27 // pred_check
          %p227 = pneg %p226
        $region30: #{tpu_custom_call.1} parent=27 // pred_check_branch
          %229 = sbr.rel (%p227) target = $region32
        $region31: #{tpu_custom_call.1} parent=27 // pred_region
          %v230 = vlaneseq
          %vm231 = vcmp.ge.s32.totalorder %v230, 0
          %vm232 = vcmp.lt.s32.totalorder %v230, 256
          %vm233 = vmand %vm231, %vm232
          %234 = vst.msk [vmem:[#allocation2] sm:$0x3] %vm233, 0.0
        $region32: #{tpu_custom_call.1} parent=27 // pred_fallthru
          _
        %v235 = vld [vmem:[%s212] sm:$0xff]
        %v236 = vld [vmem:[%s212 + $0x8] sm:$0xff]
        %v237 = vld [vmem:[%s212 + $0x10] sm:$0xf]
        %v238 = vld [vmem:[%s212 + $0x18] sm:$0xf]
        %v239 = vld [vmem:[%s223] sm:$0x3]
        %vm240 = vcmp.eq.s32.totalorder %v239, 4294967196
        %v241 = vsel %vm240, 11, %v239
        %vm242 = vcmask 1043456
        %v243 = vsel %vm242, %v237, -inf
        %v244 = vmax.f32 %v235, %v243
        %v245 = vrot.slane %v244, 4
        %v246 = vmax.f32 %v244, %v245
        %v247 = vrot.slane %v246, 2
        %v248 = vmax.f32 %v246, %v247
        %v249 = vrot.slane %v248, 1
        %v250 = vmax.f32 %v248, %v249
        %v251 = vsel %vm242, %v238, -inf
        %v252 = vmax.f32 %v236, %v251
        %v253 = vrot.slane %v252, 4
        %v254 = vmax.f32 %v252, %v253
        %v255 = vrot.slane %v254, 2
        %v256 = vmax.f32 %v254, %v255
        %v257 = vrot.slane %v256, 1
        %v258 = vmax.f32 %v256, %v257
        %v259 = vsub.f32 %v235, %v250
        %v260 = vsub.f32 %v236, %v258
        %v261 = vsub.f32 %v237, %v250
        %v262 = vsub.f32 %v238, %v258
        %v263 = vmul.f32 %v259, 1.442695
        %v264 = vpow.pop %v263
        %v265 = vmul.f32 %v260, 1.442695
        %v266 = vpow.pop %v265
        %v267 = vmul.f32 %v261, 1.442695
        %v268 = vpow.pop %v267
        %v269 = vmul.f32 %v262, 1.442695
        %v270 = vpow.pop %v269
        %v271 = vsel %vm242, %v268, 0.0
        %v272 = vadd.f32 %v264, %v271
        %v273 = vrot.slane %v272, 4
        %v274 = vadd.f32 %v272, %v273
        %v275 = vrot.slane %v274, 2
        %v276 = vadd.f32 %v274, %v275
        %v277 = vrot.slane %v276, 1
        %v278 = vadd.f32 %v276, %v277
        %v279 = vsel %vm242, %v270, 0.0
        %v280 = vadd.f32 %v266, %v279
        %v281 = vrot.slane %v280, 4
        %v282 = vadd.f32 %v280, %v281
        %v283 = vrot.slane %v282, 2
        %v284 = vadd.f32 %v282, %v283
        %v285 = vrot.slane %v284, 1
        %v286 = vadd.f32 %v284, %v285
        %v287 = vrcp.pop %v278
        %v288 = vrcp.pop %v286
        %v289 = vmul.f32 %v264, %v287
        %v290 = vmul.f32 %v266, %v288
        %v291 = vmul.f32 %v268, %v287
        %v292 = vmul.f32 %v270, %v288
        %v293 = vlaneseq
        %v294 = vshrl.u32 %v293, 7
        %v295 = vadd.s32 %v294, 8
        %v296 = vlaneseq
        %v297 = vshrl.u32 %v296, 7
        %v298 = vsub.s32 0, %v297
        %v299 = vrot.slane %v241, %v298
        %v300 = vlaneseq
        %v301 = vshrl.u32 %v300, 7
        %v302 = vsub.s32 1, %v301
        %v303 = vrot.slane %v241, %v302
        %vm304 = vcmp.eq.s32.totalorder %v294, %v299
        %vm305 = vcmp.eq.s32.totalorder %v294, %v303
        %vm306 = vcmp.eq.s32.totalorder %v295, %v299
        %vm307 = vcmp.eq.s32.totalorder %v295, %v303
        %v308 = vsel %vm304, 1, 0
        %v309 = vsel %vm305, 1, 0
        %v310 = vsel %vm306, 1, 0
        %v311 = vsel %vm307, 1, 0
        %v312 = vcvt.s32.f32 %v308
        %v313 = vcvt.s32.f32 %v309
        %v314 = vcvt.s32.f32 %v310
        %v315 = vcvt.s32.f32 %v311
        %v316 = vsub.f32 %v289, %v312
        %v317 = vsub.f32 %v290, %v313
        %v318 = vsub.f32 %v291, %v314
        %v319 = vsub.f32 %v292, %v315
        %v320 = vmul.f32 %v316, %v316
        %v321 = vmul.f32 %v317, %v317
        %v322 = vmul.f32 %v318, %v318
        %v323 = vmul.f32 %v319, %v319
        %vm324 = vcmask 1042432
        %v325 = vsel %vm324, %v322, 0.0
        %v326 = vadd.f32 %v320, %v325
        %v327 = vrot.slane %v326, 4
        %v328 = vadd.f32 %v326, %v327
        %v329 = vrot.slane %v328, 2
        %v330 = vadd.f32 %v328, %v329
        %v331 = vrot.slane %v330, 1
        %v332 = vadd.f32 %v330, %v331
        %v333 = vsel %vm324, %v323, 0.0
        %v334 = vadd.f32 %v321, %v333
        %v335 = vrot.slane %v334, 4
        %v336 = vadd.f32 %v334, %v335
        %v337 = vrot.slane %v336, 2
        %v338 = vadd.f32 %v336, %v337
        %v339 = vrot.slane %v338, 1
        %v340 = vadd.f32 %v338, %v339
        %v341 = vld [vmem:[#allocation2] sm:$0x3]
        %v344 = vcombine.low %v332, %v340
        %v346 = vunpack.c.l.s4 1966171168
        %v347 = vunpack.c.0.s8 %v346
        %v348 = vlaneseq
        %v349 = vshrl.u32 %v348, 7
        %v350 = vsub.s32 %v347, %v349
        %v351 = vrot.slane %v344, %v350
        %v353 = vunpack.c.l.s4 1966171168
        %v354 = vunpack.c.0.s8 %v353
        %v355 = vlaneseq
        %v356 = vshrl.u32 %v355, 7
        %v357 = vsub.s32 %v354, %v356
        %v358 = vrot.slane %v351, %v357
        %v360 = vadd.f32 %v341, %v358
        %v361 = vlaneseq
        %vm362 = vcmp.ge.s32.totalorder %v361, 0
        %vm363 = vcmp.lt.s32.totalorder %v361, 256
        %vm364 = vmand %vm362, %vm363
        %365 = vst.msk [vmem:[#allocation2] sm:$0x3] %vm364, %v360
        // Predicated region
        $region33: #{tpu_custom_call.1} parent=27 // pred_check
          %p366 = pneg %p226
        $region34: #{tpu_custom_call.1} parent=27 // pred_check_branch
          %368 = sbr.rel (%p366) target = $region36
        $region35: #{tpu_custom_call.1} parent=27 // pred_region
          %v369 = vld [vmem:[#allocation2] sm:$0x3]
          %v371 = vlaneseq
          %v372 = vshrl.u32 %v371, 7
          %v373 = vsub.s32 0, %v372
          %v374 = vrot.slane %v369, %v373
          %v375 = vlaneseq
          %v376 = vshrl.u32 %v375, 7
          %v377 = vsub.s32 1, %v376
          %v378 = vrot.slane %v369, %v377
          %vm381 = vcmask 1040384
          %v382 = vsel %vm381, %v374, 0.0
          %v383 = vsel %vm381, %v378, 0.0
          %v384 = vadd.f32 %v382, %v383
          %385 = vadd.xlane.f32.xlu0 %v384
          %v386 = vpop.xlane.xlu0 %385
          %v387 = vrot.slane %v386, 4
          %v388 = vadd.f32 %v386, %v387
          %v389 = vrot.slane %v388, 2
          %v390 = vadd.f32 %v388, %v389
          %v391 = vrot.slane %v390, 1
          %v392 = vadd.f32 %v390, %v391
          %s393 = vtos %v392
          %v394 = vstv %s393
          %395 = vst [vmem:[%s202] sm:$0xff] %v394
        $region36: #{tpu_custom_call.1} parent=27 // pred_fallthru
          _
        %s396 = sand.u32 %s105, 1
        %s397 = scalar_lea.sflag [#allocation4], %s396
        %s398 = sand.u32 %s105, 1
        %s399 = smul.addr %s398, 8
        %s400 = scalar_lea.vmem [#allocation3], %s399
        // Predicated region
        $region37: #{tpu_custom_call.1} parent=27 // pred_check
          %p401 = pneg %p115
        $region38: #{tpu_custom_call.1} parent=27 // pred_check_branch
          %403 = sbr.rel (%p401) target = $region40
        $region39: #{tpu_custom_call.1} parent=27 // pred_region
          %s405 = ssub.s32 128, 128
          %406 = vsyncadd %s397, %s405
          %s407 = sadd.s32 %s22, %s21
          %s408 = smul.addr %s407, 128
          %s409 = scalar_lea.hbm %s2, %s408
          %s411 = sshll.u32 %s400, 4
          %s412 = int_to_ptr.vmem [resolvable:$true] %s411
          %414 = dma.vmem_to_hbm [thread:$0]  %s412, 128, %s409, %s397
        $region40: #{tpu_custom_call.1} parent=27 // pred_fallthru
          _
      $region28: #{tpu_custom_call.1} parent=5 // pred_fallthru
        _
      %p415 = scmp.le.s32.totalorder 2, %s11
      // Predicated region
      $region41: #{tpu_custom_call.1} parent=5 // pred_check
        %p416 = pneg %p415
      $region42: #{tpu_custom_call.1} parent=5 // pred_check_branch
        %418 = sbr.rel (%p416) target = $region44
      $region43: #{tpu_custom_call.1} parent=5 // pred_region
        %s419 = ssub.s32 %s11, 2
        // Predicated region
        $region45: #{tpu_custom_call.1} parent=43 // pred_check
          %p420 = pneg %p121
        $region46: #{tpu_custom_call.1} parent=43 // pred_check_branch
          %422 = sbr.rel (%p420) target = $region48
        $region47: #{tpu_custom_call.1} parent=43 // pred_region
          %s423 = sand.u32 %s106, 1
          %s424 = scalar_lea.sflag [#allocation4], %s423
          %s425 = sand.u32 %s106, 1
          %s426 = smul.addr %s425, 8
          %s427 = scalar_lea.vmem [#allocation3], %s426
          %428 = dma.done %s424, 128
        $region48: #{tpu_custom_call.1} parent=43 // pred_fallthru
          _
      $region44: #{tpu_custom_call.1} parent=5 // pred_fallthru
        _
    $region6: #{tpu_custom_call.1} parent=1 // loop_footer
      %s15 = sadd.s32 1, %s11
    $region7: #{tpu_custom_call.1} parent=1 // loop_footer_branch
      %10 = sbr.rel target = $region3
    $region8: #{tpu_custom_call.1} parent=1 // loop_exit
      _
    %429 = vsyncpa [#allocation4], 1
    %s430 = scalar_lea.sflag [#allocation4], 1
    %431 = vsyncpa %s430, 1

</llo_original>
